<compile_context>
chip_gen: v6e
topology: v6e:2x2x1
jax: 0.10.0
libtpu: 0.0.40
codegen_flags: <defaults>
</compile_context>

<pallas_src>
import math
import jax
import jax.numpy as jnp
from jax.experimental import pallas as pl
from jax.experimental.pallas import tpu as pltpu


def _round_up(x, m):
    return (x + m - 1) // m * m


def _tpu_generation():
    try:
        kind = jax.devices()[0].device_kind.lower()
    except Exception:
        return "unknown"
    if "7" in kind:
        return "v7x"
    if "v6" in kind:
        return "v6e"
    if "v5" in kind:
        return "v5e"
    return "unknown"


# ---------------------------------------------------------------------------
# Kernels
# ---------------------------------------------------------------------------
def ffn_resident_kernel(x_ref, w1_ref, b1_ref, w2_ref, b2_ref, o_ref):
    """Whole-FFN fused kernel; W1/W2 are VMEM-resident (constant index_map)."""
    x = x_ref[...].astype(w1_ref.dtype)                       # in-kernel bf16 cast
    h = jnp.dot(x, w1_ref[...], preferred_element_type=jnp.float32)
    h = jnp.maximum(h + b1_ref[...], 0.0)                     # bias + ReLU in f32
    # dropout (eval mode) == identity
    y = jnp.dot(h.astype(w2_ref.dtype), w2_ref[...],
                preferred_element_type=jnp.float32)
    o_ref[...] = (y + b2_ref[...]).astype(o_ref.dtype)


def ffn_streaming_kernel(x_ref, w1_ref, b1_ref, w2_ref, b2_ref, o_ref):
    """d_ff-tiled kernel: accumulate the 2nd matmul directly into the f32 output."""
    k = pl.program_id(1)

    @pl.when(k == 0)
    def _init():
        # Fold b2 into the accumulator init (output block revisited across k).
        o_ref[...] = jnp.broadcast_to(b2_ref[...], o_ref.shape)

    x = x_ref[...].astype(w1_ref.dtype)
    h = jnp.dot(x, w1_ref[...], preferred_element_type=jnp.float32)
    h = jnp.maximum(h + b1_ref[...], 0.0)
    # dropout (eval mode) == identity
    o_ref[...] += jnp.dot(h.astype(w2_ref.dtype), w2_ref[...],
                          preferred_element_type=jnp.float32)


# ---------------------------------------------------------------------------
# Planning (one-time, shape/param dependent)
# ---------------------------------------------------------------------------
def make_ffn_plan(d_model, d_ff, use_bf16=True):
    gen = _tpu_generation()
    compute_dtype = jnp.bfloat16 if use_bf16 else jnp.float32
    itemsize = jnp.dtype(compute_dtype).itemsize
    d_model_p = _round_up(d_model, 128)

    if gen == "v7x":
        tm_pref, tff_pref = 512, 1024
        vmem_limit = 48 * 1024 * 1024          # 64 MiB is the whole TC budget
        resident_budget = 16 * 1024 * 1024
        tm_resident = 256
    elif gen == "v6e":
        tm_pref, tff_pref = 1024, 2048
        vmem_limit = 96 * 1024 * 1024
        resident_budget = 48 * 1024 * 1024
        tm_resident = 512
    elif gen == "v5e":
        tm_pref, tff_pref = 256, 1024
        vmem_limit = 96 * 1024 * 1024
        resident_budget = 48 * 1024 * 1024
        tm_resident = 256
    else:  # unknown / older: conservative (this limit is known-good here)
        tm_pref, tff_pref = 256, 1024
        vmem_limit = 64 * 1024 * 1024
        resident_budget = 24 * 1024 * 1024
        tm_resident = 256

    # ---- resident-weight layout: weights DMA'd exactly once -----------------
    d_ff_res = _round_up(d_ff, 128)
    weight_bytes = 2 * d_model_p * d_ff_res * itemsize
    resident = weight_bytes <= resident_budget
    tm = tm_resident
    tff = d_ff_res
    d_ff_p = d_ff_res
    if resident:
        def footprint(t):
            return (weight_bytes
                    + 2 * t * d_model_p * 4        # x tile, double-buffered (f32)
                    + 2 * t * d_model_p * 4        # out tile, double-buffered (f32)
                    + t * d_ff_p * 4               # h intermediate (f32)
                    + (d_ff_p + d_model_p) * 4)    # biases
        while tm > 128 and footprint(tm) > int(0.85 * vmem_limit):
            tm //= 2
        if footprint(tm) > int(0.85 * vmem_limit):
            resident = False

    # ---- streaming layout: d_ff tiled on an "arbitrary" grid axis -----------
    if not resident:
        tff = min(tff_pref, _round_up(d_ff, 256))   # 256-multiples for 2x256^2 MXU
        tm = tm_pref

        def footprint(t, f):
            return (2 * 2 * d_model_p * f * itemsize   # W1 + W2 chunks, double-buffered
                    + 2 * t * d_model_p * 4            # x tile, double-buffered
                    + 2 * t * d_model_p * 4            # out tile, double-buffered
                    + t * f * 4                        # h intermediate
                    + 2 * (f + d_model_p) * 4)         # bias chunks
        while tm > 256 and footprint(tm, tff) > int(0.85 * vmem_limit):
            tm //= 2
        while tff > 256 and footprint(tm, tff) > int(0.85 * vmem_limit):
            tff -= 256
        d_ff_p = _round_up(d_ff, tff)                  # pad d_ff UP to a tff multiple

    return dict(gen=gen, compute_dtype=compute_dtype, d_model=d_model, d_ff=d_ff,
                d_model_p=d_model_p, d_ff_p=d_ff_p, tm=tm, tff=tff,
                resident=resident, vmem_limit=vmem_limit)


def prepare_ffn_params(plan, w1_t, b1, w2_t, b2):
    """One-time weight padding + cast (hoisted out of the forward pass)."""
    d_model, d_ff = w1_t.shape
    d_model_p, d_ff_p = plan["d_model_p"], plan["d_ff_p"]
    cd = plan["compute_dtype"]
    w1p = jnp.zeros((d_model_p, d_ff_p), cd).at[:d_model, :d_ff].set(w1_t.astype(cd))
    w2p = jnp.zeros((d_ff_p, d_model_p), cd).at[:d_ff, :d_model].set(w2_t.astype(cd))
    b1p = jnp.zeros((1, d_ff_p), jnp.float32).at[0, :d_ff].set(b1.astype(jnp.float32))
    b2p = jnp.zeros((1, d_model_p), jnp.float32).at[0, :d_model].set(b2.astype(jnp.float32))
    return w1p, b1p, w2p, b2p


# ---------------------------------------------------------------------------
# Forward pass
# ---------------------------------------------------------------------------
def feed_forward_block(x, params, plan):
    """x: (batch, seq, d_model). Returns same shape/dtype."""
    w1p, b1p, w2p, b2p = params
    batch, seq, d_model = x.shape
    d_model_p, d_ff_p, tff = plan["d_model_p"], plan["d_ff_p"], plan["tff"]
    M = batch * seq

    tm = min(plan["tm"], _round_up(M, 8))
    M_p = _round_up(M, tm)

    x2d = x.reshape(M, d_model)
    if (M_p, d_model_p) != (M, d_model):
        # zero-pad rows/cols (padded region sliced off below); skipped when aligned
        x2d = jnp.zeros((M_p, d_model_p), x.dtype).at[:M, :d_model].set(x2d)

    itemsize = jnp.dtype(plan["compute_dtype"]).itemsize
    weight_bytes = (w1p.size + w2p.size) * itemsize
    x_bytes = M_p * d_model_p * x2d.dtype.itemsize
    out_bytes = M_p * d_model_p * 4
    flops = 4 * M_p * d_model_p * d_ff_p

    if plan["resident"]:
        cost = pl.CostEstimate(flops=flops, transcendentals=0,
                               bytes_accessed=x_bytes + weight_bytes + out_bytes)
        out = pl.pallas_call(
            ffn_resident_kernel,
            out_shape=jax.ShapeDtypeStruct((M_p, d_model_p), jnp.float32),
            grid_spec=pltpu.PrefetchScalarGridSpec(
                num_scalar_prefetch=0,
                grid=(M_p // tm,),
                in_specs=[
                    pl.BlockSpec((tm, d_model_p), lambda i: (i, 0)),       # x row tile
                    pl.BlockSpec((d_model_p, d_ff_p), lambda i: (0, 0)),   # W1^T resident
                    pl.BlockSpec((1, d_ff_p), lambda i: (0, 0)),           # b1 resident
                    pl.BlockSpec((d_ff_p, d_model_p), lambda i: (0, 0)),   # W2^T resident
                    pl.BlockSpec((1, d_model_p), lambda i: (0, 0)),        # b2 resident
                ],
                out_specs=pl.BlockSpec((tm, d_model_p), lambda i: (i, 0)),
            ),
            compiler_params=pltpu.CompilerParams(
                dimension_semantics=("parallel",),
                vmem_limit_bytes=plan["vmem_limit"],
            ),
            cost_estimate=cost,
        )(x2d, w1p, b1p, w2p, b2p)
    else:
        n_row_tiles = M_p // tm
        cost = pl.CostEstimate(flops=flops, transcendentals=0,
                               bytes_accessed=x_bytes + n_row_tiles * weight_bytes
                               + out_bytes)
        out = pl.pallas_call(
            ffn_streaming_kernel,
            out_shape=jax.ShapeDtypeStruct((M_p, d_model_p), jnp.float32),
            grid_spec=pltpu.PrefetchScalarGridSpec(
                num_scalar_prefetch=0,
                grid=(n_row_tiles, d_ff_p // tff),
                in_specs=[
                    pl.BlockSpec((tm, d_model_p), lambda i, k: (i, 0)),    # x row tile
                    pl.BlockSpec((d_model_p, tff), lambda i, k: (0, k)),   # W1^T chunk
                    pl.BlockSpec((1, tff), lambda i, k: (0, k)),           # b1 chunk
                    pl.BlockSpec((tff, d_model_p), lambda i, k: (k, 0)),   # W2^T chunk
                    pl.BlockSpec((1, d_model_p), lambda i, k: (0, 0)),     # b2
                ],
                out_specs=pl.BlockSpec((tm, d_model_p), lambda i, k: (i, 0)),
            ),
            compiler_params=pltpu.CompilerParams(
                dimension_semantics=("parallel", "arbitrary"),
                vmem_limit_bytes=plan["vmem_limit"],
            ),
            cost_estimate=cost,
        )(x2d, w1p, b1p, w2p, b2p)

    return out[:M, :d_model].astype(x.dtype).reshape(batch, seq, d_model)


# ---------------------------------------------------------------------------
# Reference / init / test
# ---------------------------------------------------------------------------
def init_params(key, d_model, d_ff):
    """Deterministic init mimicking nn.Linear (uniform +-1/sqrt(fan_in)),
    stored pre-transposed in (in, out) layout for the kernel."""
    k1, k2, k3, k4 = jax.random.split(key, 4)
    bound1 = 1.0 / math.sqrt(d_model)
    bound2 = 1.0 / math.sqrt(d_ff)
    w1_t = jax.random.uniform(k1, (d_model, d_ff), jnp.float32, -bound1, bound1)
    b1 = jax.random.uniform(k2, (d_ff,), jnp.float32, -bound1, bound1)
    w2_t = jax.random.uniform(k3, (d_ff, d_model), jnp.float32, -bound2, bound2)
    b2 = jax.random.uniform(k4, (d_model,), jnp.float32, -bound2, bound2)
    return w1_t, b1, w2_t, b2


def reference_ffn(x, w1_t, b1, w2_t, b2, *, use_bf16=True):
    """Pure-JAX reference mirroring the kernel's bf16-matmul / f32-accumulate numerics.
    Note: bf16 inputs deviate from PyTorch f32 numerics by ~1e-2 rel; pass
    use_bf16=False to make_ffn_plan/here for f32-exact parity (slower MXU)."""
    cd = jnp.bfloat16 if use_bf16 else x.dtype
    h = jnp.dot(x.astype(cd), w1_t.astype(cd), preferred_element_type=jnp.float32) + b1
    h = jnp.maximum(h, 0.0)
    y = jnp.dot(h.astype(cd), w2_t.astype(cd), preferred_element_type=jnp.float32) + b2
    return y.astype(x.dtype)


if __name__ == "__main__":
    # Small but lane-dense shapes (d_model, d_ff multiples of 128).
    batch, seq, d_model, d_ff = 2, 8, 128, 256
    key = jax.random.PRNGKey(0)
    kx, kp = jax.random.split(key)

    x = jax.random.normal(kx, (batch, seq, d_model), jnp.float32)
    w1_t, b1, w2_t, b2 = init_params(kp, d_model, d_ff)

    plan = make_ffn_plan(d_model, d_ff, use_bf16=True)
    params = prepare_ffn_params(plan, w1_t, b1, w2_t, b2)   # one-time pad+cast

    out = feed_forward_block(x, params, plan)
    out = jax.block_until_ready(out)

    ref = reference_ffn(x, w1_t, b1, w2_t, b2, use_bf16=True)
    assert out.shape == (batch, seq, d_model)
    assert jnp.allclose(out, ref, atol=2e-2, rtol=2e-2), "mismatch vs reference"

    print("KERNEL_OK")
</pallas_src>

<mosaic_0001>
module attributes {stable_mosaic.version = 11 : i64} {
  func.func @ffn_resident_kernel(%arg0: i32, %arg1: memref<16x128xf32, #tpu.memory_space<vmem>>, %arg2: memref<128x256xbf16, #tpu.memory_space<vmem>>, %arg3: memref<1x256xf32, #tpu.memory_space<vmem>>, %arg4: memref<256x128xbf16, #tpu.memory_space<vmem>>, %arg5: memref<1x128xf32, #tpu.memory_space<vmem>>, %arg6: memref<16x128xf32, #tpu.memory_space<vmem>>) attributes {dimension_semantics = [#tpu.dimension_semantics<parallel>], iteration_bounds = array<i64: 1>, scalar_prefetch = 0 : i64, scratch_operands = 0 : i64, tpu.core_type = #tpu.core_type<tc>, window_params = [{transform_indices = @transform_0, window_bounds = array<i64: 16, 128>}, {pipeline_mode = #tpu.pipeline_mode<synchronous>, transform_indices = @transform_1, window_bounds = array<i64: 128, 256>}, {pipeline_mode = #tpu.pipeline_mode<synchronous>, transform_indices = @transform_2, window_bounds = array<i64: 1, 256>}, {pipeline_mode = #tpu.pipeline_mode<synchronous>, transform_indices = @transform_3, window_bounds = array<i64: 256, 128>}, {pipeline_mode = #tpu.pipeline_mode<synchronous>, transform_indices = @transform_4, window_bounds = array<i64: 1, 128>}, {transform_indices = @transform_5, window_bounds = array<i64: 16, 128>}]} {
    %c0 = arith.constant 0 : index
    %c0_0 = arith.constant 0 : index
    %0 = vector.load %arg1[%c0, %c0_0] : memref<16x128xf32, #tpu.memory_space<vmem>>, vector<16x128xf32>
    %1 = arith.truncf %0 : vector<16x128xf32> to vector<16x128xbf16>
    %c0_1 = arith.constant 0 : index
    %c0_2 = arith.constant 0 : index
    %2 = vector.load %arg2[%c0_1, %c0_2] : memref<128x256xbf16, #tpu.memory_space<vmem>>, vector<128x256xbf16>
    %cst = arith.constant dense<0.000000e+00> : vector<16x256xf32>
    %3 = tpu.matmul %1, %2, %cst {dimension_numbers = #tpu.dot_dimension_numbers<[1], [0], [0], [1], [0, 0, 1, 1], [], []>} : vector<16x128xbf16>, vector<128x256xbf16>, vector<16x256xf32> -> vector<16x256xf32>
    %c0_3 = arith.constant 0 : index
    %c0_4 = arith.constant 0 : index
    %4 = vector.load %arg3[%c0_3, %c0_4] : memref<1x256xf32, #tpu.memory_space<vmem>>, vector<1x256xf32>
    %5 = vector.broadcast %4 : vector<1x256xf32> to vector<16x256xf32>
    %6 = arith.addf %3, %5 : vector<16x256xf32>
    %cst_5 = arith.constant 0.000000e+00 : f32
    %7 = vector.broadcast %cst_5 : f32 to vector<16x256xf32>
    %8 = arith.maximumf %6, %7 : vector<16x256xf32>
    %9 = arith.truncf %8 : vector<16x256xf32> to vector<16x256xbf16>
    %c0_6 = arith.constant 0 : index
    %c0_7 = arith.constant 0 : index
    %10 = vector.load %arg4[%c0_6, %c0_7] : memref<256x128xbf16, #tpu.memory_space<vmem>>, vector<256x128xbf16>
    %cst_8 = arith.constant dense<0.000000e+00> : vector<16x128xf32>
    %11 = tpu.matmul %9, %10, %cst_8 {dimension_numbers = #tpu.dot_dimension_numbers<[1], [0], [0], [1], [0, 0, 1, 1], [], []>} : vector<16x256xbf16>, vector<256x128xbf16>, vector<16x128xf32> -> vector<16x128xf32>
    %c0_9 = arith.constant 0 : index
    %c0_10 = arith.constant 0 : index
    %12 = vector.load %arg5[%c0_9, %c0_10] : memref<1x128xf32, #tpu.memory_space<vmem>>, vector<1x128xf32>
    %13 = vector.broadcast %12 : vector<1x128xf32> to vector<16x128xf32>
    %14 = arith.addf %11, %13 : vector<16x128xf32>
    %c0_11 = arith.constant 0 : index
    %c0_12 = arith.constant 0 : index
    %15 = vector.load %arg6[%c0_11, %c0_12] : memref<16x128xf32, #tpu.memory_space<vmem>>, vector<16x128xf32>
    tpu.vector_store %arg6[%c0_11, %c0_12], %14 {strides = array<i32>} : memref<16x128xf32, #tpu.memory_space<vmem>>, vector<16x128xf32>,
    return
  }
  func.func @transform_0(%arg0: i32) -> (i32, i32) {
    %c0_i32 = arith.constant 0 : i32
    %c0_i32_0 = arith.constant 0 : i32
    return %arg0, %c0_i32 : i32, i32
  }
  func.func @transform_1(%arg0: i32) -> (i32, i32) {
    %c0_i32 = arith.constant 0 : i32
    %c0_i32_0 = arith.constant 0 : i32
    %c0_i32_1 = arith.constant 0 : i32
    return %c0_i32, %c0_i32_0 : i32, i32
  }
  func.func @transform_2(%arg0: i32) -> (i32, i32) {
    %c0_i32 = arith.constant 0 : i32
    %c0_i32_0 = arith.constant 0 : i32
    %c0_i32_1 = arith.constant 0 : i32
    return %c0_i32, %c0_i32_0 : i32, i32
  }
  func.func @transform_3(%arg0: i32) -> (i32, i32) {
    %c0_i32 = arith.constant 0 : i32
    %c0_i32_0 = arith.constant 0 : i32
    %c0_i32_1 = arith.constant 0 : i32
    return %c0_i32, %c0_i32_0 : i32, i32
  }
  func.func @transform_4(%arg0: i32) -> (i32, i32) {
    %c0_i32 = arith.constant 0 : i32
    %c0_i32_0 = arith.constant 0 : i32
    %c0_i32_1 = arith.constant 0 : i32
    return %c0_i32, %c0_i32_0 : i32, i32
  }
  func.func @transform_5(%arg0: i32) -> (i32, i32) {
    %c0_i32 = arith.constant 0 : i32
    %c0_i32_0 = arith.constant 0 : i32
    return %arg0, %c0_i32 : i32, i32
  }
}

</mosaic_0001>

<llo_original>
// kernel: tpu_custom_call.1
$region0: #{tpu_custom_call.1}
  #allocation0 [shape = 'u32[]', space=smem, size = 0x4, offset = 0x4, fixed_abs, tag = 'smem constant byte address 0x4 - core index']
  #allocation1 [shape = 'u32[144,128]{1,0:T(1,128)}', space=vmem, size = 0x12000, scoped, tag = 'internal scratch']
  %s0 = inlined_call_operand.hbm [shape: f32[16,128], index: 0, kind: input, shape index: {}]
  %s1 = inlined_call_operand.hbm [shape: bf16[128,256], index: 1, kind: input, shape index: {}]
  %s2 = inlined_call_operand.vmem [shape: f32[1,256], index: 2, kind: input, shape index: {}]
  %s3 = inlined_call_operand.hbm [shape: bf16[256,128], index: 3, kind: input, shape index: {}]
  %s4 = inlined_call_operand.vmem [shape: f32[1,128], index: 4, kind: input, shape index: {}]
  %s5 = inlined_call_operand.hbm [shape: f32[16,128], index: 5, kind: output, shape index: {}]
  %s6 = sld [smem:[#allocation0]]
  $region42: #{tpu_custom_call.1} parent=0
    _
  %s8 = ssub.s32 1, %s6
  %s9 = scalar_select 0, %s8, %s6
  $region1: #{tpu_custom_call.1} parent=0
    #allocation2 [shape = 'u8[8192]{0}', space=vmem, size = 0x2000, scoped, tag = 'input window, operand 0, single buffered']
    #allocation3 [shape = 's32[1]{0}', space=sflag, size = 0x4, scoped, tag = 'scoped memory for tpu_custom_call.1']
    #allocation4 [shape = 's32[1]{0}', space=sflag, size = 0x4, scoped, tag = 'scoped memory for tpu_custom_call.1']
    #allocation5 [shape = 'u8[65536]{0}', space=vmem, size = 0x10000, scoped, tag = 'input window, operand 1, single buffered']
    #allocation6 [shape = 's32[1]{0}', space=sflag, size = 0x4, scoped, tag = 'scoped memory for tpu_custom_call.1']
    #allocation7 [shape = 'u8[65536]{0}', space=vmem, size = 0x10000, scoped, tag = 'input window, operand 3, single buffered']
    #allocation8 [shape = 'u8[8192]{0}', space=vmem, size = 0x2000, scoped, tag = 'output window, operand 0, single buffered']
    %10 = vsyncpa [#allocation3], 0
    %11 = vsyncpa [#allocation6], 0
    %12 = vsyncpa [#allocation4], 0
    // Predicated region
    $region2: #{tpu_custom_call.1} parent=1 // pred_check
      _
    $region3: #{tpu_custom_call.1} parent=1 // pred_check_branch
      %14 = sbr.rel (0) target = $region5
    $region4: #{tpu_custom_call.1} parent=1 // pred_region
      %s16 = ssub.s32 256, 256
      %17 = vsyncadd [#allocation3], %s16
      %s18 = sshll.u32 [#allocation2], 4
      %s19 = int_to_ptr.vmem [resolvable:$true] %s18
      %24 = dma.hbm_to_vmem [thread:$0]  %s0, 256, %s19, [#allocation3], 128, 128, 8
    $region5: #{tpu_custom_call.1} parent=1 // pred_fallthru
      _
    // Predicated region
    $region6: #{tpu_custom_call.1} parent=1 // pred_check
      _
    $region7: #{tpu_custom_call.1} parent=1 // pred_check_branch
      %26 = sbr.rel (0) target = $region9
    $region8: #{tpu_custom_call.1} parent=1 // pred_region
      %s28 = ssub.s32 2048, 2048
      %29 = vsyncadd [#allocation6], %s28
      %s30 = sshll.u32 [#allocation5], 4
      %s31 = int_to_ptr.vmem [resolvable:$true] %s30
      %36 = dma.hbm_to_vmem [thread:$0]  %s1, 2048, %s31, [#allocation6], 128, 128, 8
    $region9: #{tpu_custom_call.1} parent=1 // pred_fallthru
      _
    // Predicated region
    $region10: #{tpu_custom_call.1} parent=1 // pred_check
      _
    $region11: #{tpu_custom_call.1} parent=1 // pred_check_branch
      %38 = sbr.rel (0) target = $region13
    $region12: #{tpu_custom_call.1} parent=1 // pred_region
      _
    $region13: #{tpu_custom_call.1} parent=1 // pred_fallthru
      _
    // Predicated region
    $region14: #{tpu_custom_call.1} parent=1 // pred_check
      _
    $region15: #{tpu_custom_call.1} parent=1 // pred_check_branch
      %40 = sbr.rel (0) target = $region17
    $region16: #{tpu_custom_call.1} parent=1 // pred_region
      %s42 = ssub.s32 2048, 2048
      %43 = vsyncadd [#allocation6], %s42
      %s44 = sshll.u32 [#allocation7], 4
      %s45 = int_to_ptr.vmem [resolvable:$true] %s44
      %50 = dma.hbm_to_vmem [thread:$0]  %s3, 2048, %s45, [#allocation6], 64, 64, 4
    $region17: #{tpu_custom_call.1} parent=1 // pred_fallthru
      _
    // Predicated region
    $region18: #{tpu_custom_call.1} parent=1 // pred_check
      _
    $region19: #{tpu_custom_call.1} parent=1 // pred_check_branch
      %52 = sbr.rel (0) target = $region21
    $region20: #{tpu_custom_call.1} parent=1 // pred_region
      _
    $region21: #{tpu_custom_call.1} parent=1 // pred_fallthru
      _
    // Predicated region
    $region22: #{tpu_custom_call.1} parent=1 // pred_check
      _
    $region23: #{tpu_custom_call.1} parent=1 // pred_check_branch
      %54 = sbr.rel (0) target = $region25
    $region24: #{tpu_custom_call.1} parent=1 // pred_region
      %55 = dma.done [#allocation3], 256
    $region25: #{tpu_custom_call.1} parent=1 // pred_fallthru
      _
    // Predicated region
    $region26: #{tpu_custom_call.1} parent=1 // pred_check
      _
    $region27: #{tpu_custom_call.1} parent=1 // pred_check_branch
      %57 = sbr.rel (0) target = $region29
    $region28: #{tpu_custom_call.1} parent=1 // pred_region
      %58 = dma.done [#allocation6], 2048
    $region29: #{tpu_custom_call.1} parent=1 // pred_fallthru
      _
    // Predicated region
    $region30: #{tpu_custom_call.1} parent=1 // pred_check
      _
    $region31: #{tpu_custom_call.1} parent=1 // pred_check_branch
      %60 = sbr.rel (0) target = $region33
    $region32: #{tpu_custom_call.1} parent=1 // pred_region
      %61 = dma.done [#allocation6], 2048
    $region33: #{tpu_custom_call.1} parent=1 // pred_fallthru
      _
    %v63 = vld [vmem:[#allocation2] sm:$0xff]
    %v64 = vld [vmem:[#allocation2 + $0x8] sm:$0xff]
    %v65 = vpack.c.bf16 %v64, %v63
    %v66 = vld [vmem:[#allocation5] sm:$0xff]
    %v67 = vld [vmem:[#allocation5 + $0x8] sm:$0xff]
    %v68 = vld [vmem:[#allocation5 + $0x10] sm:$0xff]
    %v69 = vld [vmem:[#allocation5 + $0x18] sm:$0xff]
    %v70 = vld [vmem:[#allocation5 + $0x20] sm:$0xff]
    %v71 = vld [vmem:[#allocation5 + $0x28] sm:$0xff]
    %v72 = vld [vmem:[#allocation5 + $0x30] sm:$0xff]
    %v73 = vld [vmem:[#allocation5 + $0x38] sm:$0xff]
    %v74 = vld [vmem:[#allocation5 + $0x40] sm:$0xff]
    %v75 = vld [vmem:[#allocation5 + $0x48] sm:$0xff]
    %v76 = vld [vmem:[#allocation5 + $0x50] sm:$0xff]
    %v77 = vld [vmem:[#allocation5 + $0x58] sm:$0xff]
    %v78 = vld [vmem:[#allocation5 + $0x60] sm:$0xff]
    %v79 = vld [vmem:[#allocation5 + $0x68] sm:$0xff]
    %v80 = vld [vmem:[#allocation5 + $0x70] sm:$0xff]
    %v81 = vld [vmem:[#allocation5 + $0x78] sm:$0xff]
    %v82 = vld [vmem:[%s2] sm:$0x3]
    %v84 = vlaneseq
    %v85 = vshrl.u32 %v84, 7
    %v86 = vsub.s32 0, %v85
    %v87 = vrot.slane %v82, %v86
    %v88 = vlaneseq
    %v89 = vshrl.u32 %v88, 7
    %v90 = vsub.s32 1, %v89
    %v91 = vrot.slane %v82, %v90
    %v110 = vunpack.c.l.b16 %v66
    %v111 = vunpack.c.h.b16 %v66
    %v112 = vunpack.c.l.b16 %v67
    %v113 = vunpack.c.h.b16 %v67
    %v114 = vunpack.c.l.b16 %v68
    %v115 = vunpack.c.h.b16 %v68
    %v116 = vunpack.c.l.b16 %v69
    %v117 = vunpack.c.h.b16 %v69
    %v118 = vunpack.c.l.b16 %v70
    %v119 = vunpack.c.h.b16 %v70
    %v120 = vunpack.c.l.b16 %v71
    %v121 = vunpack.c.h.b16 %v71
    %v122 = vunpack.c.l.b16 %v72
    %v123 = vunpack.c.h.b16 %v72
    %v124 = vunpack.c.l.b16 %v73
    %v125 = vunpack.c.h.b16 %v73
    %v126 = vunpack.c.l.b16 %v74
    %v127 = vunpack.c.h.b16 %v74
    %v128 = vunpack.c.l.b16 %v75
    %v129 = vunpack.c.h.b16 %v75
    %v130 = vunpack.c.l.b16 %v76
    %v131 = vunpack.c.h.b16 %v76
    %v132 = vunpack.c.l.b16 %v77
    %v133 = vunpack.c.h.b16 %v77
    %v134 = vunpack.c.l.b16 %v78
    %v135 = vunpack.c.h.b16 %v78
    %v136 = vunpack.c.l.b16 %v79
    %v137 = vunpack.c.h.b16 %v79
    %v138 = vunpack.c.l.b16 %v80
    %v139 = vunpack.c.h.b16 %v80
    %v140 = vunpack.c.l.b16 %v81
    %v141 = vunpack.c.h.b16 %v81
    %v142 = vpack.c.b16 %v112, %v110
    %v143 = vpack.c.b16 %v113, %v111
    %v144 = vpack.c.b16 %v116, %v114
    %v145 = vpack.c.b16 %v117, %v115
    %v146 = vpack.c.b16 %v120, %v118
    %v147 = vpack.c.b16 %v121, %v119
    %v148 = vpack.c.b16 %v124, %v122
    %v149 = vpack.c.b16 %v125, %v123
    %v150 = vpack.c.b16 %v128, %v126
    %v151 = vpack.c.b16 %v129, %v127
    %v152 = vpack.c.b16 %v132, %v130
    %v153 = vpack.c.b16 %v133, %v131
    %v154 = vpack.c.b16 %v136, %v134
    %v155 = vpack.c.b16 %v137, %v135
    %v156 = vpack.c.b16 %v140, %v138
    %v157 = vpack.c.b16 %v141, %v139
    %174 = vmatprep.subr.bf16.mxu0 %v157
    %175 = vmatpush1.bf16.msra.mxu0 %v156
    %176 = vmatprep.subr.bf16.mxu0 %v155
    %177 = vmatpush1.bf16.msra.mxu0 %v154
    %178 = vmatprep.subr.bf16.mxu0 %v153
    %179 = vmatpush1.bf16.msra.mxu0 %v152
    %180 = vmatprep.subr.bf16.mxu0 %v151
    %181 = vmatpush1.bf16.msra.mxu0 %v150
    %182 = vmatprep.subr.bf16.mxu0 %v149
    %183 = vmatpush1.bf16.msra.mxu0 %v148
    %184 = vmatprep.subr.bf16.mxu0 %v147
    %185 = vmatpush1.bf16.msra.mxu0 %v146
    %186 = vmatprep.subr.bf16.mxu0 %v145
    %187 = vmatpush1.bf16.msra.mxu0 %v144
    %188 = vmatprep.subr.bf16.mxu0 %v143
    %189 = vmatpush1.bf16.msra.mxu0 %v142
    %190 = vmatprep.subr.bf16.mxu0 0
    %191 = vmatpush2.bf16.msra.mxu0 0
    %192 = vmatprep.subr.bf16.mxu0 0
    %193 = vmatpush2.bf16.msra.mxu0 0
    %194 = vmatprep.subr.bf16.mxu0 0
    %195 = vmatpush2.bf16.msra.mxu0 0
    %196 = vmatprep.subr.bf16.mxu0 0
    %197 = vmatpush2.bf16.msra.mxu0 0
    %198 = vmatprep.subr.bf16.mxu0 0
    %199 = vmatpush2.bf16.msra.mxu0 0
    %200 = vmatprep.subr.bf16.mxu0 0
    %201 = vmatpush2.bf16.msra.mxu0 0
    %202 = vmatprep.subr.bf16.mxu0 0
    %203 = vmatpush2.bf16.msra.mxu0 0
    %204 = vmatprep.subr.bf16.mxu0 0
    %205 = vmatpush2.bf16.msra.mxu0 0
    %206 = vmatprep.mubr.bf16.mxu0 0
    %207 = vmatmul.mubr.bf16.gmra.mxu0 %v65
    %v208 = vpop.f32.mrf.mxu0
    %v209 = vadd.f32 %v87, %v208
    %v210 = vpop.f32.mrf.mxu0
    %v211 = vadd.f32 %v91, %v210
    %v212 = vpop.f32.mrf.mxu0
    %v213 = vadd.f32 %v87, %v212
    %v214 = vpop.f32.mrf.mxu0
    %v215 = vadd.f32 %v91, %v214
    %216 = vdwg.mxu0
    %v217 = vmax.f32 %v209, 0.0
    %v218 = vmax.f32 %v211, 0.0
    %v219 = vmax.f32 %v213, 0.0
    %v220 = vmax.f32 %v215, 0.0
    %v221 = vpack.c.bf16 %v219, %v217
    %v222 = vpack.c.bf16 %v220, %v218
    %v223 = vld [vmem:[#allocation7] sm:$0xf]
    %v224 = vld [vmem:[#allocation7 + $0x4] sm:$0xf]
    %v225 = vld [vmem:[#allocation7 + $0x8] sm:$0xf]
    %v226 = vld [vmem:[#allocation7 + $0xc] sm:$0xf]
    %v227 = vld [vmem:[#allocation7 + $0x10] sm:$0xf]
    %v228 = vld [vmem:[#allocation7 + $0x14] sm:$0xf]
    %v229 = vld [vmem:[#allocation7 + $0x18] sm:$0xf]
    %v230 = vld [vmem:[#allocation7 + $0x1c] sm:$0xf]
    %v231 = vld [vmem:[#allocation7 + $0x20] sm:$0xf]
    %v232 = vld [vmem:[#allocation7 + $0x24] sm:$0xf]
    %v233 = vld [vmem:[#allocation7 + $0x28] sm:$0xf]
    %v234 = vld [vmem:[#allocation7 + $0x2c] sm:$0xf]
    %v235 = vld [vmem:[#allocation7 + $0x30] sm:$0xf]
    %v236 = vld [vmem:[#allocation7 + $0x34] sm:$0xf]
    %v237 = vld [vmem:[#allocation7 + $0x38] sm:$0xf]
    %v238 = vld [vmem:[#allocation7 + $0x3c] sm:$0xf]
    %v239 = vld [vmem:[#allocation7 + $0x40] sm:$0xf]
    %v240 = vld [vmem:[#allocation7 + $0x44] sm:$0xf]
    %v241 = vld [vmem:[#allocation7 + $0x48] sm:$0xf]
    %v242 = vld [vmem:[#allocation7 + $0x4c] sm:$0xf]
    %v243 = vld [vmem:[#allocation7 + $0x50] sm:$0xf]
    %v244 = vld [vmem:[#allocation7 + $0x54] sm:$0xf]
    %v245 = vld [vmem:[#allocation7 + $0x58] sm:$0xf]
    %v246 = vld [vmem:[#allocation7 + $0x5c] sm:$0xf]
    %v247 = vld [vmem:[#allocation7 + $0x60] sm:$0xf]
    %v248 = vld [vmem:[#allocation7 + $0x64] sm:$0xf]
    %v249 = vld [vmem:[#allocation7 + $0x68] sm:$0xf]
    %v250 = vld [vmem:[#allocation7 + $0x6c] sm:$0xf]
    %v251 = vld [vmem:[#allocation7 + $0x70] sm:$0xf]
    %v252 = vld [vmem:[#allocation7 + $0x74] sm:$0xf]
    %v253 = vld [vmem:[#allocation7 + $0x78] sm:$0xf]
    %v254 = vld [vmem:[#allocation7 + $0x7c] sm:$0xf]
    %v255 = vld [vmem:[%s4] sm:$0x1]
    %v257 = vlaneseq
    %v258 = vshrl.u32 %v257, 7
    %v259 = vsub.s32 0, %v258
    %v260 = vrot.slane %v255, %v259
    %v294 = vunpack.c.l.b16 %v223
    %v295 = vunpack.c.l.b16 %v224
    %v296 = vunpack.c.l.b16 %v225
    %v297 = vunpack.c.l.b16 %v226
    %v298 = vunpack.c.l.b16 %v227
    %v299 = vunpack.c.l.b16 %v228
    %v300 = vunpack.c.l.b16 %v229
    %v301 = vunpack.c.l.b16 %v230
    %v302 = vunpack.c.l.b16 %v231
    %v303 = vunpack.c.l.b16 %v232
    %v304 = vunpack.c.l.b16 %v233
    %v305 = vunpack.c.l.b16 %v234
    %v306 = vunpack.c.l.b16 %v235
    %v307 = vunpack.c.l.b16 %v236
    %v308 = vunpack.c.l.b16 %v237
    %v309 = vunpack.c.l.b16 %v238
    %v310 = vunpack.c.l.b16 %v239
    %v311 = vunpack.c.l.b16 %v240
    %v312 = vunpack.c.l.b16 %v241
    %v313 = vunpack.c.l.b16 %v242
    %v314 = vunpack.c.l.b16 %v243
    %v315 = vunpack.c.l.b16 %v244
    %v316 = vunpack.c.l.b16 %v245
    %v317 = vunpack.c.l.b16 %v246
    %v318 = vunpack.c.l.b16 %v247
    %v319 = vunpack.c.l.b16 %v248
    %v320 = vunpack.c.l.b16 %v249
    %v321 = vunpack.c.l.b16 %v250
    %v322 = vunpack.c.l.b16 %v251
    %v323 = vunpack.c.l.b16 %v252
    %v324 = vunpack.c.l.b16 %v253
    %v325 = vunpack.c.l.b16 %v254
    %v326 = vpack.c.b16 %v295, %v294
    %v327 = vpack.c.b16 %v297, %v296
    %v328 = vpack.c.b16 %v299, %v298
    %v329 = vpack.c.b16 %v301, %v300
    %v330 = vpack.c.b16 %v303, %v302
    %v331 = vpack.c.b16 %v305, %v304
    %v332 = vpack.c.b16 %v307, %v306
    %v333 = vpack.c.b16 %v309, %v308
    %v334 = vpack.c.b16 %v311, %v310
    %v335 = vpack.c.b16 %v313, %v312
    %v336 = vpack.c.b16 %v315, %v314
    %v337 = vpack.c.b16 %v317, %v316
    %v338 = vpack.c.b16 %v319, %v318
    %v339 = vpack.c.b16 %v321, %v320
    %v340 = vpack.c.b16 %v323, %v322
    %v341 = vpack.c.b16 %v325, %v324
    %358 = vmatprep.subr.bf16.mxu0 0
    %359 = vmatpush1.bf16.msra.mxu0 %v333
    %360 = vmatprep.subr.bf16.mxu0 0
    %361 = vmatpush1.bf16.msra.mxu0 %v332
    %362 = vmatprep.subr.bf16.mxu0 0
    %363 = vmatpush1.bf16.msra.mxu0 %v331
    %364 = vmatprep.subr.bf16.mxu0 0
    %365 = vmatpush1.bf16.msra.mxu0 %v330
    %366 = vmatprep.subr.bf16.mxu0 0
    %367 = vmatpush1.bf16.msra.mxu0 %v329
    %368 = vmatprep.subr.bf16.mxu0 0
    %369 = vmatpush1.bf16.msra.mxu0 %v328
    %370 = vmatprep.subr.bf16.mxu0 0
    %371 = vmatpush1.bf16.msra.mxu0 %v327
    %372 = vmatprep.subr.bf16.mxu0 0
    %373 = vmatpush1.bf16.msra.mxu0 %v326
    %374 = vmatprep.subr.bf16.mxu0 0
    %375 = vmatpush2.bf16.msra.mxu0 %v341
    %376 = vmatprep.subr.bf16.mxu0 0
    %377 = vmatpush2.bf16.msra.mxu0 %v340
    %378 = vmatprep.subr.bf16.mxu0 0
    %379 = vmatpush2.bf16.msra.mxu0 %v339
    %380 = vmatprep.subr.bf16.mxu0 0
    %381 = vmatpush2.bf16.msra.mxu0 %v338
    %382 = vmatprep.subr.bf16.mxu0 0
    %383 = vmatpush2.bf16.msra.mxu0 %v337
    %384 = vmatprep.subr.bf16.mxu0 0
    %385 = vmatpush2.bf16.msra.mxu0 %v336
    %386 = vmatprep.subr.bf16.mxu0 0
    %387 = vmatpush2.bf16.msra.mxu0 %v335
    %388 = vmatprep.subr.bf16.mxu0 0
    %389 = vmatpush2.bf16.msra.mxu0 %v334
    %390 = vmatprep.mubr.bf16.mxu0 %v222
    %391 = vmatmul.mubr.bf16.gmra.mxu0 %v221
    %v392 = vpop.f32.mrf.mxu0
    %v393 = vadd.f32 %v260, %v392
    %v394 = vpop.f32.mrf.mxu0
    %v395 = vpop.f32.mrf.mxu0
    %v396 = vadd.f32 %v260, %v395
    %v397 = vpop.f32.mrf.mxu0
    %398 = vdwg.mxu0
    %399 = vst [vmem:[#allocation8] sm:$0xff] %v393
    %400 = vst [vmem:[#allocation8 + $0x8] sm:$0xff] %v396
    // Predicated region
    $region34: #{tpu_custom_call.1} parent=1 // pred_check
      _
    $region35: #{tpu_custom_call.1} parent=1 // pred_check_branch
      %402 = sbr.rel (0) target = $region37
    $region36: #{tpu_custom_call.1} parent=1 // pred_region
      %s404 = ssub.s32 256, 256
      %405 = vsyncadd [#allocation4], %s404
      %s406 = sshll.u32 [#allocation8], 4
      %s407 = int_to_ptr.vmem [resolvable:$true] %s406
      %412 = dma.vmem_to_hbm [thread:$0]  %s407, 256, %s5, [#allocation4], 128, 128, 8
    $region37: #{tpu_custom_call.1} parent=1 // pred_fallthru
      _
    // Predicated region
    $region38: #{tpu_custom_call.1} parent=1 // pred_check
      _
    $region39: #{tpu_custom_call.1} parent=1 // pred_check_branch
      %414 = sbr.rel (0) target = $region41
    $region40: #{tpu_custom_call.1} parent=1 // pred_region
      %415 = dma.done [#allocation4], 256
    $region41: #{tpu_custom_call.1} parent=1 // pred_fallthru
      _
    %416 = vsyncpa [#allocation3], 1
    %417 = vsyncpa [#allocation6], 1
    %418 = vsyncpa [#allocation4], 1

</llo_original>
